<compile_context>
chip_gen: v5e
topology: v5e:2x2
jax: 0.10.0
libtpu: 0.0.40
codegen_flags: <defaults>
</compile_context>

<pallas_src>
import functools
import numpy as np
import jax
import jax.numpy as jnp
from jax.experimental import pallas as pl
from jax.experimental.pallas import tpu as pltpu


def _round_up(x, m):
    return (x + m - 1) // m * m


# ----------------------------------------------------------------------------
# Deterministic parameter construction (mirrors init_kernels, win_type='hamming')
# ----------------------------------------------------------------------------
def make_stft_weight(win_len, fft_len, win_type="hamming"):
    if win_type is None or win_type == "None":
        window = np.ones(win_len)
    else:
        # scipy.signal.get_window('hamming', win_len, fftbins=True) ** 0.5
        n = np.arange(win_len)
        window = (0.54 - 0.46 * np.cos(2.0 * np.pi * n / win_len)) ** 0.5
    fourier_basis = np.fft.rfft(np.eye(fft_len))[:win_len]     # (win_len, fft_len//2+1)
    real_kernel = np.real(fourier_basis)
    imag_kernel = np.imag(fourier_basis)
    kernel = np.concatenate([real_kernel, imag_kernel], 1).T   # (fft_len+2, win_len)
    kernel = kernel * window                                   # broadcast over taps
    return kernel.astype(np.float32)


# ----------------------------------------------------------------------------
# Pallas kernel: in-kernel block-Toeplitz im2col + fused matmul + mags / phase
# ----------------------------------------------------------------------------
def _conv_stft_kernel(w_ref, main_ref, halo_ref, mags_ref, phase_ref, chunk_ref,
                      *, n_shifts, dim_pad, tf):
    # w_ref:     (R, 2*dim_pad, stride)   resident packed DFT weight (real|imag rows)
    # main_ref:  (1, stride, TF)          raw signal, strided layout for this tile
    # halo_ref:  (1, 1, stride, R_halo)   first R-1 frame columns of the next tile
    # chunk_ref: (stride, TF + R_halo)    VMEM scratch: stitched [main | halo]
    chunk_ref[:, :tf] = main_ref[0]
    chunk_ref[:, tf:] = halo_ref[0, 0]

    acc = jnp.zeros((2 * dim_pad, tf), jnp.float32)
    for r in range(n_shifts):               # block-Toeplitz: shift-by-r frame columns
        acc = acc + jnp.dot(w_ref[r], chunk_ref[:, r:r + tf],
                            preferred_element_type=jnp.float32)

    real = acc[:dim_pad, :]                 # sublane-aligned real/imag split
    imag = acc[dim_pad:, :]
    mags_ref[0] = jnp.sqrt(real * real + imag * imag)
    phase_ref[0] = jnp.arctan2(imag, real)


def _choose_frame_tile(num_frames, batch, max_tile):
    """Pick TF (multiple of 128): trade tail-frame padding vs per-step overhead."""
    max_tile = max(128, (int(max_tile) // 128) * 128)   # guard: multiple of 128
    best_tf, best_score = 128, None
    for tf in range(128, max_tile + 1, 128):
        n_tiles = -(-num_frames // tf)
        # v7x: keep both TensorCores busy when B == 1 (need >= 2 parallel tiles)
        if batch == 1 and num_frames > 128 and n_tiles < 2:
            continue
        f_pad = n_tiles * tf
        # padded frames + ~0.35us/step fixed cost expressed in frame-equivalents
        score = f_pad + 128 * n_tiles
        if best_score is None or score < best_score or (score == best_score and tf > best_tf):
            best_tf, best_score = tf, score
    return best_tf


@functools.partial(jax.jit, static_argnames=("win_len", "stride", "fft_len", "frame_tile"))
def conv_stft(x, weight, *, win_len, stride, fft_len, frame_tile=512):
    """x: (B, T) or (B, 1, T) float32. weight: (fft_len+2, win_len) float32.

    Returns (mags, phase), each (B, fft_len//2+1, num_frames) — identical to the
    PyTorch ConvSTFT forward with feature_type='real'.
    """
    if x.ndim == 3:
        x = x[:, 0, :]
    B, T = x.shape
    assert T >= win_len, "signal shorter than the analysis window"
    num_frames = (T - win_len) // stride + 1
    dim = fft_len // 2 + 1

    dim_pad = _round_up(dim, 8)              # sublane-aligned real/imag split
    R = -(-win_len // stride)                # block-Toeplitz depth (taps / stride)
    k_pad = R * stride
    TF = _choose_frame_tile(num_frames, B, frame_tile)
    n_tiles = -(-num_frames // TF)
    F_pad = n_tiles * TF
    R_halo = max(R - 1, 1)
    # TODO(synk): extreme win_len/stride ratios (> TF) would need a wider halo.
    assert R_halo <= TF, "win_len/stride ratio too large for the frame tile"

    # --- glue: pack weight as (R, 2*dim_pad, stride); rows [real|pad|imag|pad],
    #     taps zero-padded to R*stride so the r-th slab is W[:, r*stride:(r+1)*stride].
    w_real = weight[:dim, :]
    w_imag = weight[dim:, :]
    w2 = jnp.concatenate(
        [jnp.pad(w_real, ((0, dim_pad - dim), (0, 0))),
         jnp.pad(w_imag, ((0, dim_pad - dim), (0, 0)))], axis=0)
    w2 = jnp.pad(w2, ((0, 0), (0, k_pad - win_len))).astype(jnp.float32)
    w_packed = jnp.transpose(w2.reshape(2 * dim_pad, R, stride), (1, 0, 2))

    # --- glue: raw signal in strided layout — NO im2col, NO gather. --------------
    # x3[b, m, s] = x[b, m*stride + s];  main has frames on lanes: xT[b, s, m].
    M_total = F_pad + R_halo
    L = M_total * stride
    x = x.astype(jnp.float32)
    x_use = x[:, :L] if T >= L else jnp.pad(x, ((0, 0), (0, L - T)))
    x3 = x_use.reshape(B, M_total, stride)
    xT_main = jnp.transpose(x3[:, :F_pad, :], (0, 2, 1))           # (B, stride, F_pad)
    # per-tile halo: first R-1 frame columns of the *next* tile (tiny)
    halo_rows = x3[:, TF:, :]                                       # (B, M_total-TF, stride)
    halo_rows = jnp.pad(halo_rows, ((0, 0), (0, TF - R_halo), (0, 0)))
    halo4 = halo_rows.reshape(B, n_tiles, TF, stride)[:, :, :R_halo, :]
    halo4 = jnp.transpose(halo4, (0, 1, 3, 2))                      # (B, n_tiles, stride, R_halo)

    grid = (B, n_tiles)
    kernel = functools.partial(_conv_stft_kernel, n_shifts=R, dim_pad=dim_pad, tf=TF)

    flops = 2 * B * F_pad * (2 * dim_pad) * k_pad
    transcendentals = 2 * B * F_pad * dim_pad                       # sqrt + atan2
    bytes_accessed = 4 * (B * stride * F_pad                        # raw signal in
                          + B * n_tiles * stride * R_halo           # halo in
                          + R * 2 * dim_pad * stride                # weight in
                          + 2 * B * dim_pad * F_pad)                # mags + phase out

    mags_full, phase_full = pl.pallas_call(
        kernel,
        out_shape=(
            jax.ShapeDtypeStruct((B, dim_pad, F_pad), jnp.float32),
            jax.ShapeDtypeStruct((B, dim_pad, F_pad), jnp.float32),
        ),
        grid=grid,
        in_specs=[
            # weight: constant index_map -> stays resident in VMEM across the grid
            pl.BlockSpec((R, 2 * dim_pad, stride), lambda b, j: (0, 0, 0)),
            pl.BlockSpec((1, stride, TF), lambda b, j: (b, 0, j)),
            pl.BlockSpec((1, 1, stride, R_halo), lambda b, j: (b, j, 0, 0)),
        ],
        out_specs=(
            pl.BlockSpec((1, dim_pad, TF), lambda b, j: (b, 0, j)),
            pl.BlockSpec((1, dim_pad, TF), lambda b, j: (b, 0, j)),
        ),
        scratch_shapes=[pltpu.VMEM((stride, TF + R_halo), jnp.float32)],
        compiler_params=pltpu.CompilerParams(
            dimension_semantics=("parallel", "parallel"),
            vmem_limit_bytes=48 * 1024 * 1024,      # v5e scoped default is only 16 MiB
        ),
        cost_estimate=pl.CostEstimate(
            flops=flops,
            transcendentals=transcendentals,
            bytes_accessed=bytes_accessed,
        ),
    )(w_packed, xT_main, halo4)

    # --- glue: slice off padding; already in PyTorch (B, dim, num_frames) layout ---
    mags = mags_full[:, :dim, :num_frames]
    phase = phase_full[:, :dim, :num_frames]
    return mags, phase


# ----------------------------------------------------------------------------
# Pure-JAX reference (raw real/imag conv outputs for robust checking)
# ----------------------------------------------------------------------------
def conv_stft_ref(x, weight, *, win_len, stride, fft_len):
    B, T = x.shape
    num_frames = (T - win_len) // stride + 1
    dim = fft_len // 2 + 1
    idx = jnp.arange(num_frames)[:, None] * stride + jnp.arange(win_len)[None, :]
    frames = x[:, idx]                                     # (B, F, K)
    out = jnp.einsum("bfk,ck->bcf", frames, weight)        # (B, fft_len+2, F)
    return out[:, :dim, :], out[:, dim:, :]


if __name__ == "__main__":
    # Small, ConvSTFT-consistent sizes.
    win_len, win_inc, fft_len = 16, 8, 16
    B, T = 2, 80                                # num_frames = 9

    weight = jnp.asarray(make_stft_weight(win_len, fft_len, win_type="hamming"))
    x = jax.random.normal(jax.random.PRNGKey(0), (B, T), dtype=jnp.float32)

    mags, phase = conv_stft(x, weight, win_len=win_len, stride=win_inc, fft_len=fft_len)
    mags, phase = jax.block_until_ready((mags, phase))

    num_frames = (T - win_len) // win_inc + 1
    dim = fft_len // 2 + 1
    assert mags.shape == (B, dim, num_frames)
    assert phase.shape == mags.shape

    # Correctness: magnitude directly, phase via reconstruction of the complex conv
    # output (robust to atan2 ambiguity at near-zero magnitude).
    real_ref, imag_ref = conv_stft_ref(x, weight, win_len=win_len, stride=win_inc,
                                       fft_len=fft_len)
    mags_ref = jnp.sqrt(real_ref * real_ref + imag_ref * imag_ref)
    np.testing.assert_allclose(np.asarray(mags), np.asarray(mags_ref),
                               atol=1e-4, rtol=1e-4)
    np.testing.assert_allclose(np.asarray(mags * jnp.cos(phase)), np.asarray(real_ref),
                               atol=1e-4, rtol=1e-4)
    np.testing.assert_allclose(np.asarray(mags * jnp.sin(phase)), np.asarray(imag_ref),
                               atol=1e-4, rtol=1e-4)

    print("KERNEL_OK")
</pallas_src>

<mosaic_0001>
module attributes {stable_mosaic.version = 11 : i64} {
  func.func @_conv_stft_kernel(%arg0: i32, %arg1: i32, %arg2: memref<2x32x8xf32, #tpu.memory_space<vmem>>, %arg3: memref<1x8x128xf32, #tpu.memory_space<vmem>>, %arg4: memref<1x1x8x1xf32, #tpu.memory_space<vmem>>, %arg5: memref<1x16x128xf32, #tpu.memory_space<vmem>>, %arg6: memref<1x16x128xf32, #tpu.memory_space<vmem>>, %arg7: memref<8x129xf32, #tpu.memory_space<vmem>>) attributes {dimension_semantics = [#tpu.dimension_semantics<parallel>, #tpu.dimension_semantics<parallel>], iteration_bounds = array<i64: 2, 1>, scalar_prefetch = 0 : i64, scratch_operands = 1 : i64, tpu.core_type = #tpu.core_type<tc>, window_params = [{pipeline_mode = #tpu.pipeline_mode<synchronous>, transform_indices = @transform_0, window_bounds = array<i64: 2, 32, 8>}, {transform_indices = @transform_1, window_bounds = array<i64: 1, 8, 128>}, {transform_indices = @transform_2, window_bounds = array<i64: 1, 1, 8, 1>}, {transform_indices = @transform_3, window_bounds = array<i64: 1, 16, 128>}, {transform_indices = @transform_4, window_bounds = array<i64: 1, 16, 128>}]} {
    %c0 = arith.constant 0 : index
    %c0_0 = arith.constant 0 : index
    %c0_1 = arith.constant 0 : index
    %0 = vector.load %arg3[%c0, %c0_0, %c0_1] : memref<1x8x128xf32, #tpu.memory_space<vmem>>, vector<1x8x128xf32>
    %1 = vector.shape_cast %0 : vector<1x8x128xf32> to vector<8x128xf32>
    %c0_2 = arith.constant 0 : index
    %c0_3 = arith.constant 0 : index
    %2 = vector.load %arg7[%c0_2, %c0_3] : memref<8x129xf32, #tpu.memory_space<vmem>>, vector<8x128xf32>
    tpu.vector_store %arg7[%c0_2, %c0_3], %1 {strides = array<i32>} : memref<8x129xf32, #tpu.memory_space<vmem>>, vector<8x128xf32>,
    %c0_4 = arith.constant 0 : index
    %c0_5 = arith.constant 0 : index
    %c0_6 = arith.constant 0 : index
    %c0_7 = arith.constant 0 : index
    %3 = vector.load %arg4[%c0_4, %c0_5, %c0_6, %c0_7] : memref<1x1x8x1xf32, #tpu.memory_space<vmem>>, vector<1x1x8x1xf32>
    %4 = vector.shape_cast %3 : vector<1x1x8x1xf32> to vector<8x1xf32>
    %c0_8 = arith.constant 0 : index
    %c128 = arith.constant 128 : index
    %5 = vector.load %arg7[%c0_8, %c128] : memref<8x129xf32, #tpu.memory_space<vmem>>, vector<8x1xf32>
    tpu.vector_store %arg7[%c0_8, %c128], %4 {strides = array<i32>} : memref<8x129xf32, #tpu.memory_space<vmem>>, vector<8x1xf32>,
    %cst = arith.constant 0.000000e+00 : f32
    %6 = vector.broadcast %cst : f32 to vector<32x128xf32>
    %c0_9 = arith.constant 0 : index
    %c0_10 = arith.constant 0 : index
    %c0_11 = arith.constant 0 : index
    %7 = vector.load %arg2[%c0_9, %c0_10, %c0_11] : memref<2x32x8xf32, #tpu.memory_space<vmem>>, vector<1x32x8xf32>
    %8 = vector.shape_cast %7 : vector<1x32x8xf32> to vector<32x8xf32>
    %c0_12 = arith.constant 0 : index
    %c0_13 = arith.constant 0 : index
    %9 = vector.load %arg7[%c0_12, %c0_13] : memref<8x129xf32, #tpu.memory_space<vmem>>, vector<8x128xf32>
    %cst_14 = arith.constant dense<0.000000e+00> : vector<32x128xf32>
    %10 = tpu.matmul %8, %9, %cst_14 {dimension_numbers = #tpu.dot_dimension_numbers<[1], [0], [0], [1], [0, 0, 1, 1], [], []>} : vector<32x8xf32>, vector<8x128xf32>, vector<32x128xf32> -> vector<32x128xf32>
    %11 = arith.addf %6, %10 : vector<32x128xf32>
    %c1 = arith.constant 1 : index
    %c0_15 = arith.constant 0 : index
    %c0_16 = arith.constant 0 : index
    %12 = vector.load %arg2[%c1, %c0_15, %c0_16] : memref<2x32x8xf32, #tpu.memory_space<vmem>>, vector<1x32x8xf32>
    %13 = vector.shape_cast %12 : vector<1x32x8xf32> to vector<32x8xf32>
    %c0_17 = arith.constant 0 : index
    %c1_18 = arith.constant 1 : index
    %14 = vector.load %arg7[%c0_17, %c1_18] : memref<8x129xf32, #tpu.memory_space<vmem>>, vector<8x128xf32>
    %cst_19 = arith.constant dense<0.000000e+00> : vector<32x128xf32>
    %15 = tpu.matmul %13, %14, %cst_19 {dimension_numbers = #tpu.dot_dimension_numbers<[1], [0], [0], [1], [0, 0, 1, 1], [], []>} : vector<32x8xf32>, vector<8x128xf32>, vector<32x128xf32> -> vector<32x128xf32>
    %16 = arith.addf %11, %15 : vector<32x128xf32>
    %17 = vector.extract_strided_slice %16 {offsets = [0, 0], sizes = [16, 128], strides = [1, 1]} : vector<32x128xf32> to vector<16x128xf32>
    %18 = vector.extract_strided_slice %16 {offsets = [16, 0], sizes = [16, 128], strides = [1, 1]} : vector<32x128xf32> to vector<16x128xf32>
    %19 = arith.mulf %17, %17 : vector<16x128xf32>
    %20 = arith.mulf %18, %18 : vector<16x128xf32>
    %21 = arith.addf %19, %20 : vector<16x128xf32>
    %22 = math.sqrt %21 : vector<16x128xf32>
    %c0_20 = arith.constant 0 : index
    %c0_21 = arith.constant 0 : index
    %c0_22 = arith.constant 0 : index
    %23 = vector.load %arg5[%c0_20, %c0_21, %c0_22] : memref<1x16x128xf32, #tpu.memory_space<vmem>>, vector<1x16x128xf32>
    %24 = vector.shape_cast %23 : vector<1x16x128xf32> to vector<16x128xf32>
    %25 = vector.shape_cast %22 : vector<16x128xf32> to vector<1x16x128xf32>
    tpu.vector_store %arg5[%c0_20, %c0_21, %c0_22], %25 {strides = array<i32>} : memref<1x16x128xf32, #tpu.memory_space<vmem>>, vector<1x16x128xf32>,
    %26 = math.atan2 %18, %17 : vector<16x128xf32>
    %c0_23 = arith.constant 0 : index
    %c0_24 = arith.constant 0 : index
    %c0_25 = arith.constant 0 : index
    %27 = vector.load %arg6[%c0_23, %c0_24, %c0_25] : memref<1x16x128xf32, #tpu.memory_space<vmem>>, vector<1x16x128xf32>
    %28 = vector.shape_cast %27 : vector<1x16x128xf32> to vector<16x128xf32>
    %29 = vector.shape_cast %26 : vector<16x128xf32> to vector<1x16x128xf32>
    tpu.vector_store %arg6[%c0_23, %c0_24, %c0_25], %29 {strides = array<i32>} : memref<1x16x128xf32, #tpu.memory_space<vmem>>, vector<1x16x128xf32>,
    return
  }
  func.func @transform_0(%arg0: i32, %arg1: i32) -> (i32, i32, i32) {
    %c0_i32 = arith.constant 0 : i32
    %c0_i32_0 = arith.constant 0 : i32
    %c0_i32_1 = arith.constant 0 : i32
    %c0_i32_2 = arith.constant 0 : i32
    return %c0_i32, %c0_i32_0, %c0_i32_1 : i32, i32, i32
  }
  func.func @transform_1(%arg0: i32, %arg1: i32) -> (i32, i32, i32) {
    %c0_i32 = arith.constant 0 : i32
    %c0_i32_0 = arith.constant 0 : i32
    return %arg0, %c0_i32, %arg1 : i32, i32, i32
  }
  func.func @transform_2(%arg0: i32, %arg1: i32) -> (i32, i32, i32, i32) {
    %c0_i32 = arith.constant 0 : i32
    %c0_i32_0 = arith.constant 0 : i32
    %c0_i32_1 = arith.constant 0 : i32
    return %arg0, %arg1, %c0_i32, %c0_i32_0 : i32, i32, i32, i32
  }
  func.func @transform_3(%arg0: i32, %arg1: i32) -> (i32, i32, i32) {
    %c0_i32 = arith.constant 0 : i32
    %c0_i32_0 = arith.constant 0 : i32
    return %arg0, %c0_i32, %arg1 : i32, i32, i32
  }
  func.func @transform_4(%arg0: i32, %arg1: i32) -> (i32, i32, i32) {
    %c0_i32 = arith.constant 0 : i32
    %c0_i32_0 = arith.constant 0 : i32
    return %arg0, %c0_i32, %arg1 : i32, i32, i32
  }
}

</mosaic_0001>

<llo_original>
// kernel: conv_stft.1
$region0: #{conv_stft.1}
  #allocation0 [shape = 'u32[]', space=smem, size = 0x4, offset = 0x4, fixed_abs, tag = 'smem constant byte address 0x4 - core index']
  #allocation1 [shape = 'u32[72,128]{1,0:T(1,128)}', space=vmem, size = 0x9000, scoped, tag = 'internal scratch']
  #allocation2 [shape = 'f32[8,129]{1,0:T(8,128)}', space=vmem, size = 0x2000, scoped, tag = 'scratch operand']
  %s0 = inlined_call_operand.vmem [shape: f32[2,32,8], index: 0, kind: input, shape index: {}]
  %s1 = inlined_call_operand.vmem [shape: f32[2,8,128], index: 1, kind: input, shape index: {}]
  %s2 = inlined_call_operand.vmem [shape: f32[2,1,8,1], index: 2, kind: input, shape index: {}]
  %s3 = inlined_call_operand.vmem [shape: f32[2,16,128], index: 3, kind: output, shape index: {0}]
  %s4 = inlined_call_operand.vmem [shape: f32[2,16,128], index: 4, kind: output, shape index: {1}]
  %5 = xla_tuple %s3, %s4
  %s6 = sld [smem:[#allocation0]]
  $region53: #{conv_stft.1} parent=0
    _
  %s8 = ssub.s32 1, %s6
  %s9 = scalar_select 0, %s8, %s6
  loop: start=0, step=1, limit=4
  $region2: #{conv_stft.1} parent=0 // loop_pre_header
    _
  $region3: #{conv_stft.1} parent=0 // loop_header
    %s11 = sphi 0, %s15
    %p12 = scmp.ge.s32.totalorder %s11, 4
    %s18 = sphi 0, %s30
    %s19 = sphi 0, %s26
    %s20 = sphi 0, %s18
    %s21 = sphi 0, %s19
    %s22 = sphi 0, %s20
    %s23 = sphi 0, %s21
    %s31 = sphi 0, %s31
    %s33 = sphi 0, %s31
    %s34 = sphi 0, %s33
    %s48 = sphi 0, %s34
    %s56 = sphi 0, %s58
    %s59 = sphi 0, %s56
    %s60 = sphi 0, %s59
    %s76 = sphi 0, %s60
    %s84 = sphi 0, %s86
    %s87 = sphi 0, %s84
    %s88 = sphi 0, %s87
    %s104 = sphi 0, %s88
    %s112 = sphi 0, %s114
    %s115 = sphi 0, %s112
    %s116 = sphi 0, %s115
    %s132 = sphi 0, %s116
    %s140 = sphi 0, %s142
    %s143 = sphi 0, %s140
    %s144 = sphi 0, %s143
    %s160 = sphi 0, %s144
  $region4: #{conv_stft.1} parent=0 // loop_header_branch
    %14 = sbr.rel (%p12) target = $region8
  $region5: #{conv_stft.1} parent=0 // loop_body
    %s16 = ssub.s32 %s11, 1
    %s17 = ssub.s32 %s11, 2
    %s24 = sadd.s32 1, %s19
    %p25 = scmp.ge.s32.totalorder %s24, 1
    %s26 = scalar_select %p25, 0, %s24
    %s27 = sadd.s32 1, %s18
    %s28 = scalar_select %p25, %s27, %s18
    %p29 = scmp.ge.s32.totalorder %s28, 2
    %s30 = scalar_select %p29, 0, %s28
    %s32 = sadd.s32 %s31, 1
    %p35 = scmp.eq.s32.totalorder %s11, 1
    %p36 = scmp.ne.s32.totalorder %s31, %s33
    %p37 = scmp.eq.s32.totalorder %s11, 0
    %p38 = por %p36, %p37
    %p39 = scmp.ne.s32.totalorder %s31, %s33
    %p40 = scmp.eq.s32.totalorder %s16, 1
    %p41 = por %p39, %p40
    %p42 = scmp.ne.s32.totalorder %s33, %s34
    %p43 = scmp.eq.s32.totalorder %s16, 0
    %p44 = por %p42, %p43
    %p45 = scmp.ne.s32.totalorder %s33, %s34
    %p46 = scmp.eq.s32.totalorder %s17, 1
    %p47 = por %p45, %p46
    %p49 = scmp.ne.s32.totalorder %s34, %s48
    %p50 = scmp.eq.s32.totalorder %s17, 0
    %p51 = por %p49, %p50
    %s52 = ssub.s32 %s18, %s30
    %s53 = ssub.s32 %s19, %s26
    %s54 = sor.u32 %s52, %s53
    %p55 = scmp.eq.s32.totalorder %s54, 0
    %s57 = sadd.s32 %s56, 1
    %s58 = scalar_select %p55, %s56, %s57
    %p61 = pneg %p55
    %p62 = scmp.eq.s32.totalorder %s11, 1
    %p63 = por %p61, %p62
    %p64 = scmp.ne.s32.totalorder %s56, %s59
    %p65 = scmp.eq.s32.totalorder %s11, 0
    %p66 = por %p64, %p65
    %p67 = scmp.ne.s32.totalorder %s56, %s59
    %p68 = scmp.eq.s32.totalorder %s16, 1
    %p69 = por %p67, %p68
    %p70 = scmp.ne.s32.totalorder %s59, %s60
    %p71 = scmp.eq.s32.totalorder %s16, 0
    %p72 = por %p70, %p71
    %p73 = scmp.ne.s32.totalorder %s59, %s60
    %p74 = scmp.eq.s32.totalorder %s17, 1
    %p75 = por %p73, %p74
    %p77 = scmp.ne.s32.totalorder %s60, %s76
    %p78 = scmp.eq.s32.totalorder %s17, 0
    %p79 = por %p77, %p78
    %s80 = ssub.s32 %s18, %s30
    %s81 = ssub.s32 %s19, %s26
    %s82 = sor.u32 %s80, %s81
    %p83 = scmp.eq.s32.totalorder %s82, 0
    %s85 = sadd.s32 %s84, 1
    %s86 = scalar_select %p83, %s84, %s85
    %p89 = pneg %p83
    %p90 = scmp.eq.s32.totalorder %s11, 1
    %p91 = por %p89, %p90
    %p92 = scmp.ne.s32.totalorder %s84, %s87
    %p93 = scmp.eq.s32.totalorder %s11, 0
    %p94 = por %p92, %p93
    %p95 = scmp.ne.s32.totalorder %s84, %s87
    %p96 = scmp.eq.s32.totalorder %s16, 1
    %p97 = por %p95, %p96
    %p98 = scmp.ne.s32.totalorder %s87, %s88
    %p99 = scmp.eq.s32.totalorder %s16, 0
    %p100 = por %p98, %p99
    %p101 = scmp.ne.s32.totalorder %s87, %s88
    %p102 = scmp.eq.s32.totalorder %s17, 1
    %p103 = por %p101, %p102
    %p105 = scmp.ne.s32.totalorder %s88, %s104
    %p106 = scmp.eq.s32.totalorder %s17, 0
    %p107 = por %p105, %p106
    %s108 = ssub.s32 %s18, %s30
    %s109 = ssub.s32 %s19, %s26
    %s110 = sor.u32 %s108, %s109
    %p111 = scmp.eq.s32.totalorder %s110, 0
    %s113 = sadd.s32 %s112, 1
    %s114 = scalar_select %p111, %s112, %s113
    %p117 = pneg %p111
    %p118 = scmp.eq.s32.totalorder %s11, 1
    %p119 = por %p117, %p118
    %p120 = scmp.ne.s32.totalorder %s112, %s115
    %p121 = scmp.eq.s32.totalorder %s11, 0
    %p122 = por %p120, %p121
    %p123 = scmp.ne.s32.totalorder %s112, %s115
    %p124 = scmp.eq.s32.totalorder %s16, 1
    %p125 = por %p123, %p124
    %p126 = scmp.ne.s32.totalorder %s115, %s116
    %p127 = scmp.eq.s32.totalorder %s16, 0
    %p128 = por %p126, %p127
    %p129 = scmp.ne.s32.totalorder %s115, %s116
    %p130 = scmp.eq.s32.totalorder %s17, 1
    %p131 = por %p129, %p130
    %p133 = scmp.ne.s32.totalorder %s116, %s132
    %p134 = scmp.eq.s32.totalorder %s17, 0
    %p135 = por %p133, %p134
    %s136 = ssub.s32 %s18, %s30
    %s137 = ssub.s32 %s19, %s26
    %s138 = sor.u32 %s136, %s137
    %p139 = scmp.eq.s32.totalorder %s138, 0
    %s141 = sadd.s32 %s140, 1
    %s142 = scalar_select %p139, %s140, %s141
    %p145 = pneg %p139
    %p146 = scmp.eq.s32.totalorder %s11, 1
    %p147 = por %p145, %p146
    %p148 = scmp.ne.s32.totalorder %s140, %s143
    %p149 = scmp.eq.s32.totalorder %s11, 0
    %p150 = por %p148, %p149
    %p151 = scmp.ne.s32.totalorder %s140, %s143
    %p152 = scmp.eq.s32.totalorder %s16, 1
    %p153 = por %p151, %p152
    %p154 = scmp.ne.s32.totalorder %s143, %s144
    %p155 = scmp.eq.s32.totalorder %s16, 0
    %p156 = por %p154, %p155
    %p157 = scmp.ne.s32.totalorder %s143, %s144
    %p158 = scmp.eq.s32.totalorder %s17, 1
    %p159 = por %p157, %p158
    %p161 = scmp.ne.s32.totalorder %s144, %s160
    %p162 = scmp.eq.s32.totalorder %s17, 0
    %p163 = por %p161, %p162
    %p164 = scmp.le.s32.totalorder 1, %s11
    %p165 = scmp.lt.s32.totalorder %s11, 3
    %p166 = pnand %p164, %p165
    %p167 = pneg %p166
    // Predicated region
    $region9: #{conv_stft.1} parent=5 // pred_check
      _
    $region10: #{conv_stft.1} parent=5 // pred_check_branch
      %169 = sbr.rel (%p166) target = $region12
    $region11: #{conv_stft.1} parent=5 // pred_region
      %s170 = ssub.s32 %s11, 1
      // Predicated region
      $region13: #{conv_stft.1} parent=11 // pred_check
        %p171 = pneg %p44
      $region14: #{conv_stft.1} parent=11 // pred_check_branch
        %173 = sbr.rel (%p171) target = $region16
      $region15: #{conv_stft.1} parent=11 // pred_region
        _
      $region16: #{conv_stft.1} parent=11 // pred_fallthru
        _
    $region12: #{conv_stft.1} parent=5 // pred_fallthru
      _
    %p174 = scmp.lt.s32.totalorder %s11, 2
    // Predicated region
    $region17: #{conv_stft.1} parent=5 // pred_check
      %p175 = pneg %p174
    $region18: #{conv_stft.1} parent=5 // pred_check_branch
      %177 = sbr.rel (%p175) target = $region20
    $region19: #{conv_stft.1} parent=5 // pred_region
      // Predicated region
      $region21: #{conv_stft.1} parent=19 // pred_check
        %p178 = pneg %p66
      $region22: #{conv_stft.1} parent=19 // pred_check_branch
        %180 = sbr.rel (%p178) target = $region24
      $region23: #{conv_stft.1} parent=19 // pred_region
        %p181 = scmp.lt.s32.totalorder %s18, 1
        %s182 = scalar_select %p181, %s18, 1
        %p183 = scmp.lt.s32.totalorder %s19, 0
        %s184 = scalar_select %p183, %s19, 0
        %s185 = sadd.s32 %s184, %s182
        %s186 = smul.addr %s185, 8
        %s187 = scalar_lea.vmem %s1, %s186
      $region24: #{conv_stft.1} parent=19 // pred_fallthru
        _
      // Predicated region
      $region25: #{conv_stft.1} parent=19 // pred_check
        %p188 = pneg %p94
      $region26: #{conv_stft.1} parent=19 // pred_check_branch
        %190 = sbr.rel (%p188) target = $region28
      $region27: #{conv_stft.1} parent=19 // pred_region
        %p191 = scmp.lt.s32.totalorder %s18, 1
        %s192 = scalar_select %p191, %s18, 1
        %p193 = scmp.lt.s32.totalorder %s19, 0
        %s194 = scalar_select %p193, %s19, 0
        %s195 = sadd.s32 %s194, %s192
        %s196 = smul.addr %s195, 8
        %s197 = scalar_lea.vmem %s2, %s196
      $region28: #{conv_stft.1} parent=19 // pred_fallthru
        _
    $region20: #{conv_stft.1} parent=5 // pred_fallthru
      _
    %p198 = scmp.le.s32.totalorder 1, %s11
    %p199 = scmp.lt.s32.totalorder %s11, 3
    %p200 = pnand %p198, %p199
    %p201 = pneg %p200
    // Predicated region
    $region29: #{conv_stft.1} parent=5 // pred_check
      _
    $region30: #{conv_stft.1} parent=5 // pred_check_branch
      %203 = sbr.rel (%p200) target = $region32
    $region31: #{conv_stft.1} parent=5 // pred_region
      %s204 = ssub.s32 %s11, 1
      %p205 = pneg %p44
      %p206 = pneg %p41
      %p207 = scmp.lt.s32.totalorder %s20, 1
      %s208 = scalar_select %p207, %s20, 1
      %p209 = scmp.lt.s32.totalorder %s21, 0
      %s210 = scalar_select %p209, %s21, 0
      %s211 = sadd.s32 %s210, %s208
      %s212 = smul.addr %s211, 8
      %s213 = scalar_lea.vmem %s1, %s212
      %p214 = pneg %p72
      %p215 = pneg %p69
      %p216 = scmp.lt.s32.totalorder %s20, 1
      %s217 = scalar_select %p216, %s20, 1
      %p218 = scmp.lt.s32.totalorder %s21, 0
      %s219 = scalar_select %p218, %s21, 0
      %s220 = sadd.s32 %s219, %s217
      %s221 = smul.addr %s220, 8
      %s222 = scalar_lea.vmem %s2, %s221
      %p223 = pneg %p100
      %p224 = pneg %p97
      %p225 = pneg %p128
      %p226 = pneg %p125
      %p227 = scmp.lt.s32.totalorder %s20, 1
      %s228 = scalar_select %p227, %s20, 1
      %p229 = scmp.lt.s32.totalorder %s21, 0
      %s230 = scalar_select %p229, %s21, 0
      %s231 = smul.addr %s228, 2
      %s232 = sadd.s32 %s230, %s231
      %s233 = smul.addr %s232, 8
      %s234 = scalar_lea.vmem %s3, %s233
      %p235 = pneg %p156
      %p236 = pneg %p153
      %p237 = scmp.lt.s32.totalorder %s20, 1
      %s238 = scalar_select %p237, %s20, 1
      %p239 = scmp.lt.s32.totalorder %s21, 0
      %s240 = scalar_select %p239, %s21, 0
      %s241 = smul.addr %s238, 2
      %s242 = sadd.s32 %s240, %s241
      %s243 = smul.addr %s242, 8
      %s244 = scalar_lea.vmem %s4, %s243
      %p245 = scmp.lt.s32.totalorder %s20, 1
      %s246 = scalar_select %p245, %s20, 1
      %p247 = scmp.lt.s32.totalorder %s21, 0
      %s248 = scalar_select %p247, %s21, 0
      %s249 = sadd.s32 %s248, %s246
      %s250 = smul.addr %s249, 8
      %s251 = scalar_lea.vmem %s1, %s250
      %p252 = scmp.lt.s32.totalorder %s20, 1
      %s253 = scalar_select %p252, %s20, 1
      %p254 = scmp.lt.s32.totalorder %s21, 0
      %s255 = scalar_select %p254, %s21, 0
      %s256 = sadd.s32 %s255, %s253
      %s257 = smul.addr %s256, 8
      %s258 = scalar_lea.vmem %s2, %s257
      %p259 = scmp.lt.s32.totalorder %s20, 1
      %s260 = scalar_select %p259, %s20, 1
      %p261 = scmp.lt.s32.totalorder %s21, 0
      %s262 = scalar_select %p261, %s21, 0
      %s263 = smul.addr %s260, 2
      %s264 = sadd.s32 %s262, %s263
      %s265 = smul.addr %s264, 8
      %s266 = scalar_lea.vmem %s3, %s265
      %p267 = scmp.lt.s32.totalorder %s20, 1
      %s268 = scalar_select %p267, %s20, 1
      %p269 = scmp.lt.s32.totalorder %s21, 0
      %s270 = scalar_select %p269, %s21, 0
      %s271 = smul.addr %s268, 2
      %s272 = sadd.s32 %s270, %s271
      %s273 = smul.addr %s272, 8
      %s274 = scalar_lea.vmem %s4, %s273
      %v275 = vld [vmem:[%s251] sm:$0xff]
      %276 = vst [vmem:[#allocation2] sm:$0xff] %v275
      %v277 = vld [vmem:[%s258] sm:$0xff]
      %vm278 = vcmask 7168
      %279 = vst.msk [vmem:[#allocation2 + $0x8] sm:$0xff] %vm278, %v277
      %v280 = vld [vmem:[%s0] sm:$0xff]
      %v281 = vld [vmem:[%s0 + $0x8] sm:$0xff]
      %v282 = vld [vmem:[%s0 + $0x10] sm:$0xff]
      %v283 = vld [vmem:[%s0 + $0x18] sm:$0xff]
      %v284 = vld [vmem:[#allocation2] sm:$0xff]
      %s285 = scalar_lea.vmem %s0, 32
      %v286 = vld [vmem:[%s285] sm:$0xff]
      %v287 = vld [vmem:[%s285 + $0x8] sm:$0xff]
      %v288 = vld [vmem:[%s285 + $0x10] sm:$0xff]
      %v289 = vld [vmem:[%s285 + $0x18] sm:$0xff]
      %v290 = vld [vmem:[#allocation2 + $0x8] sm:$0xff]
      %293 = vrot.lane.b32.xlu0 %v284, 127
      %v294 = vpop.permute.xlu0 %293
      %295 = vrot.lane.b32.xlu0 %v290, 127
      %v296 = vpop.permute.xlu0 %295
      %vm297 = vcmask 1039360
      %v298 = vsel %vm297, %v294, %v296
      %vm300 = vcmask 64512
      %v302 = vsel %vm300, %v286, 0
      %v305 = vsel %vm300, %v287, 0
      %v308 = vsel %vm300, %v288, 0
      %v311 = vsel %vm300, %v289, 0
      %313 = vmatpush.msra.mxu0 0.0
      %314 = vmatpush.msra.mxu0 0.0
      %315 = vmatpush.msra.mxu0 0.0
      %316 = vmatpush.msra.mxu0 0.0
      %317 = vmatpush.msra.mxu0 0.0
      %318 = vmatpush.msra.mxu0 0.0
      %319 = vmatpush.msra.mxu0 0.0
      %320 = vmatpush.msra.mxu0 0.0
      %321 = vmatpush.msra.mxu0 0.0
      %322 = vmatpush.msra.mxu0 0.0
      %323 = vmatpush.msra.mxu0 0.0
      %324 = vmatpush.msra.mxu0 0.0
      %325 = vmatpush.msra.mxu0 0.0
      %326 = vmatpush.msra.mxu0 0.0
      %327 = vmatpush.msra.mxu0 0.0
      %328 = vmatpush.msra.mxu0 %v298
      %329 = vmatmul.f32.gmra.mxu0 %v302
      %v330 = vpop.f32.mrf.mxu0
      %v331 = vadd.f32 0.0, %v330
      %332 = vmatmul.f32.gmra.mxu0 %v305
      %v333 = vpop.f32.mrf.mxu0
      %v334 = vadd.f32 0.0, %v333
      %335 = vmatmul.f32.gmra.mxu0 %v308
      %v336 = vpop.f32.mrf.mxu0
      %v337 = vadd.f32 0.0, %v336
      %338 = vmatmul.f32.gmra.mxu0 %v311
      %v339 = vpop.f32.mrf.mxu0
      %v340 = vadd.f32 0.0, %v339
      %341 = vdwg.mxu0
      %v343 = vsel %vm300, %v280, 0
      %v346 = vsel %vm300, %v281, 0
      %v349 = vsel %vm300, %v282, 0
      %v352 = vsel %vm300, %v283, 0
      %354 = vmatpush.msra.mxu0 0.0
      %355 = vmatpush.msra.mxu0 0.0
      %356 = vmatpush.msra.mxu0 0.0
      %357 = vmatpush.msra.mxu0 0.0
      %358 = vmatpush.msra.mxu0 0.0
      %359 = vmatpush.msra.mxu0 0.0
      %360 = vmatpush.msra.mxu0 0.0
      %361 = vmatpush.msra.mxu0 0.0
      %362 = vmatpush.msra.mxu0 0.0
      %363 = vmatpush.msra.mxu0 0.0
      %364 = vmatpush.msra.mxu0 0.0
      %365 = vmatpush.msra.mxu0 0.0
      %366 = vmatpush.msra.mxu0 0.0
      %367 = vmatpush.msra.mxu0 0.0
      %368 = vmatpush.msra.mxu0 0.0
      %369 = vmatpush.msra.mxu0 %v284
      %370 = vmatmul.f32.gmra.mxu0 %v343
      %v371 = vpop.f32.mrf.mxu0
      %v372 = vadd.f32 %v331, %v371
      %373 = vmatmul.f32.gmra.mxu0 %v346
      %v374 = vpop.f32.mrf.mxu0
      %v375 = vadd.f32 %v334, %v374
      %376 = vmatmul.f32.gmra.mxu0 %v349
      %v377 = vpop.f32.mrf.mxu0
      %v378 = vadd.f32 %v337, %v377
      %379 = vmatmul.f32.gmra.mxu0 %v352
      %v380 = vpop.f32.mrf.mxu0
      %v381 = vadd.f32 %v340, %v380
      %382 = vdwg.mxu0
      %v383 = vmul.f32 %v372, %v372
      %v384 = vmul.f32 %v375, %v375
      %v385 = vmul.f32 %v378, %v378
      %v386 = vmul.f32 %v381, %v381
      %v387 = vadd.f32 %v383, %v385
      %v388 = vadd.f32 %v384, %v386
      %v389 = vrsqrt.pop %v387
      %v390 = vmul.f32 %v389, %v387
      %v391 = vmul.f32 %v390, %v389
      %v392 = vmul.f32 0.5, %v391
      %v393 = vsub.f32 1.5, %v392
      %v394 = vmul.f32 %v389, %v393
      %v395 = vmul.f32 %v387, %v394
      %vm396 = vcmp.eq.f32.partialorder %v387, inf
      %v397 = vsel %vm396, %v387, %v395
      %vm398 = vcmp.eq.f32.partialorder %v387, 0.0
      %v399 = vand.u32 %v387, 2147483648
      %v400 = vsel %vm398, %v399, %v397
      %v401 = vrsqrt.pop %v388
      %v402 = vmul.f32 %v401, %v388
      %v403 = vmul.f32 %v402, %v401
      %v404 = vmul.f32 0.5, %v403
      %v405 = vsub.f32 1.5, %v404
      %v406 = vmul.f32 %v401, %v405
      %v407 = vmul.f32 %v388, %v406
      %vm408 = vcmp.eq.f32.partialorder %v388, inf
      %v409 = vsel %vm408, %v388, %v407
      %vm410 = vcmp.eq.f32.partialorder %v388, 0.0
      %v411 = vand.u32 %v388, 2147483648
      %v412 = vsel %vm410, %v411, %v409
      %413 = vst [vmem:[%s266] sm:$0xff] %v400
      %414 = vst [vmem:[%s266 + $0x8] sm:$0xff] %v412
      %v415 = vand.u32 2147483647, %v372
      %v416 = vand.u32 2147483647, %v378
      %v417 = vmin.f32 %v415, %v416
      %v418 = vmax.f32 %v415, %v416
      %v419 = vrcp.pop %v418
      %v420 = vmul.f32 %v418, %v419
      %v421 = vsub.f32 1.0, %v420
      %v422 = vmul.f32 %v419, %v421
      %v423 = vadd.f32 %v419, %v422
      %vm424 = vweird.f32 %v418
      %vm425 = vweird.f32 %v419
      %vm426 = vmor %vm424, %vm425
      %v427 = vsel %vm426, %v419, %v423
      %v428 = vand.u32 2147483647, %v418
      %vm429 = vcmp.eq.f32.partialorder %v428, 8.507059e+37
      %v430 = vand.u32 %v418, 2147483648
      %v431 = vor.u32 1.1754944e-38, %v430
      %v432 = vsel %vm429, %v431, %v427
      %v433 = vmul.f32 %v417, %v432
      %v434 = vmul.f32 %v433, %v433
      %v435 = vmul.f32 0.002785687, %v434
      %v436 = vadd.f32 %v435, -0.015866
      %v437 = vmul.f32 %v436, %v434
      %v438 = vadd.f32 %v437, 0.04247222
      %v439 = vmul.f32 %v438, %v434
      %v440 = vadd.f32 %v439, -0.074975304
      %v441 = vmul.f32 %v440, %v434
      %v442 = vadd.f32 %v441, 0.1064488
      %v443 = vmul.f32 %v442, %v434
      %v444 = vadd.f32 %v443, -0.14207031
      %v445 = vmul.f32 %v444, %v434
      %v446 = vadd.f32 %v445, 0.19993454
      %v447 = vmul.f32 %v446, %v434
      %v448 = vadd.f32 %v447, -0.33333147
      %v449 = vmul.f32 %v448, %v434
      %v450 = vmul.f32 %v449, %v433
      %v451 = vadd.f32 %v450, %v433
      %vm452 = vcmp.gt.f32.partialorder %v416, %v415
      %v453 = vsub.f32 1.5707964, %v451
      %v454 = vsel %vm452, %v453, %v451
      %vm455 = vcmp.lt.f32.partialorder %v372, 0.0
      %v456 = vsub.f32 3.1415927, %v454
      %v457 = vsel %vm455, %v456, %v454
      %vm458 = vcmp.lt.s32.totalorder %v372, 0
      %v459 = vsel %vm458, 3.1415927, 0.0
      %vm460 = vcmp.eq.f32.partialorder %v378, 0.0
      %v461 = vsel %vm460, %v459, %v457
      %vm462 = vcmp.ne.f32.partialorder %v372, %v372
      %vm463 = vcmp.ne.f32.partialorder %v378, %v378
      %vm464 = vmor %vm462, %vm463
      %v465 = vsel %vm464, nan, %v461
      %vm466 = vcmp.lt.f32.partialorder %v372, 0.0
      %v467 = vsel %vm466, 2.3561945, 0.7853982
      %vm468 = vcmp.eq.s32.totalorder %v415, inf
      %vm469 = vcmp.eq.s32.totalorder %v416, inf
      %vm470 = vmand %vm468, %vm469
      %v471 = vsel %vm470, %v467, %v465
      %v472 = vand.u32 2147483647, %v471
      %v473 = vand.u32 %v378, 2147483648
      %v474 = vor.u32 %v472, %v473
      %v475 = vand.u32 2147483647, %v375
      %v476 = vand.u32 2147483647, %v381
      %v477 = vmin.f32 %v475, %v476
      %v478 = vmax.f32 %v475, %v476
      %v479 = vrcp.pop %v478
      %v480 = vmul.f32 %v478, %v479
      %v481 = vsub.f32 1.0, %v480
      %v482 = vmul.f32 %v479, %v481
      %v483 = vadd.f32 %v479, %v482
      %vm484 = vweird.f32 %v478
      %vm485 = vweird.f32 %v479
      %vm486 = vmor %vm484, %vm485
      %v487 = vsel %vm486, %v479, %v483
      %v488 = vand.u32 2147483647, %v478
      %vm489 = vcmp.eq.f32.partialorder %v488, 8.507059e+37
      %v490 = vand.u32 %v478, 2147483648
      %v491 = vor.u32 1.1754944e-38, %v490
      %v492 = vsel %vm489, %v491, %v487
      %v493 = vmul.f32 %v477, %v492
      %v494 = vmul.f32 %v493, %v493
      %v495 = vmul.f32 0.002785687, %v494
      %v496 = vadd.f32 %v495, -0.015866
      %v497 = vmul.f32 %v496, %v494
      %v498 = vadd.f32 %v497, 0.04247222
      %v499 = vmul.f32 %v498, %v494
      %v500 = vadd.f32 %v499, -0.074975304
      %v501 = vmul.f32 %v500, %v494
      %v502 = vadd.f32 %v501, 0.1064488
      %v503 = vmul.f32 %v502, %v494
      %v504 = vadd.f32 %v503, -0.14207031
      %v505 = vmul.f32 %v504, %v494
      %v506 = vadd.f32 %v505, 0.19993454
      %v507 = vmul.f32 %v506, %v494
      %v508 = vadd.f32 %v507, -0.33333147
      %v509 = vmul.f32 %v508, %v494
      %v510 = vmul.f32 %v509, %v493
      %v511 = vadd.f32 %v510, %v493
      %vm512 = vcmp.gt.f32.partialorder %v476, %v475
      %v513 = vsub.f32 1.5707964, %v511
      %v514 = vsel %vm512, %v513, %v511
      %vm515 = vcmp.lt.f32.partialorder %v375, 0.0
      %v516 = vsub.f32 3.1415927, %v514
      %v517 = vsel %vm515, %v516, %v514
      %vm518 = vcmp.lt.s32.totalorder %v375, 0
      %v519 = vsel %vm518, 3.1415927, 0.0
      %vm520 = vcmp.eq.f32.partialorder %v381, 0.0
      %v521 = vsel %vm520, %v519, %v517
      %vm522 = vcmp.ne.f32.partialorder %v375, %v375
      %vm523 = vcmp.ne.f32.partialorder %v381, %v381
      %vm524 = vmor %vm522, %vm523
      %v525 = vsel %vm524, nan, %v521
      %vm526 = vcmp.lt.f32.partialorder %v375, 0.0
      %v527 = vsel %vm526, 2.3561945, 0.7853982
      %vm528 = vcmp.eq.s32.totalorder %v475, inf
      %vm529 = vcmp.eq.s32.totalorder %v476, inf
      %vm530 = vmand %vm528, %vm529
      %v531 = vsel %vm530, %v527, %v525
      %v532 = vand.u32 2147483647, %v531
      %v533 = vand.u32 %v381, 2147483648
      %v534 = vor.u32 %v532, %v533
      %535 = vst [vmem:[%s274] sm:$0xff] %v474
      %536 = vst [vmem:[%s274 + $0x8] sm:$0xff] %v534
      %p537 = scmp.lt.s32.totalorder %s20, 1
      %s538 = scalar_select %p537, %s20, 1
      %p539 = scmp.lt.s32.totalorder %s21, 0
      %s540 = scalar_select %p539, %s21, 0
      %s541 = smul.addr %s538, 2
      %s542 = sadd.s32 %s540, %s541
      %s543 = smul.addr %s542, 8
      %s544 = scalar_lea.vmem %s3, %s543
      %p545 = scmp.lt.s32.totalorder %s20, 1
      %s546 = scalar_select %p545, %s20, 1
      %p547 = scmp.lt.s32.totalorder %s21, 0
      %s548 = scalar_select %p547, %s21, 0
      %s549 = smul.addr %s546, 2
      %s550 = sadd.s32 %s548, %s549
      %s551 = smul.addr %s550, 8
      %s552 = scalar_lea.vmem %s4, %s551
      // Predicated region
      $region33: #{conv_stft.1} parent=31 // pred_check
        %p553 = pneg %p125
      $region34: #{conv_stft.1} parent=31 // pred_check_branch
        %555 = sbr.rel (%p553) target = $region36
      $region35: #{conv_stft.1} parent=31 // pred_region
        _
      $region36: #{conv_stft.1} parent=31 // pred_fallthru
        _
      // Predicated region
      $region37: #{conv_stft.1} parent=31 // pred_check
        %p556 = pneg %p153
      $region38: #{conv_stft.1} parent=31 // pred_check_branch
        %558 = sbr.rel (%p556) target = $region40
      $region39: #{conv_stft.1} parent=31 // pred_region
        _
      $region40: #{conv_stft.1} parent=31 // pred_fallthru
        _
    $region32: #{conv_stft.1} parent=5 // pred_fallthru
      _
    %p559 = scmp.le.s32.totalorder 2, %s11
    // Predicated region
    $region41: #{conv_stft.1} parent=5 // pred_check
      %p560 = pneg %p559
    $region42: #{conv_stft.1} parent=5 // pred_check_branch
      %562 = sbr.rel (%p560) target = $region44
    $region43: #{conv_stft.1} parent=5 // pred_region
      %s563 = ssub.s32 %s11, 2
      // Predicated region
      $region45: #{conv_stft.1} parent=43 // pred_check
        %p564 = pneg %p131
      $region46: #{conv_stft.1} parent=43 // pred_check_branch
        %566 = sbr.rel (%p564) target = $region48
      $region47: #{conv_stft.1} parent=43 // pred_region
        %p567 = scmp.lt.s32.totalorder %s22, 1
        %s568 = scalar_select %p567, %s22, 1
        %p569 = scmp.lt.s32.totalorder %s23, 0
        %s570 = scalar_select %p569, %s23, 0
        %s571 = smul.addr %s568, 2
        %s572 = sadd.s32 %s570, %s571
        %s573 = smul.addr %s572, 8
        %s574 = scalar_lea.vmem %s3, %s573
      $region48: #{conv_stft.1} parent=43 // pred_fallthru
        _
      // Predicated region
      $region49: #{conv_stft.1} parent=43 // pred_check
        %p575 = pneg %p159
      $region50: #{conv_stft.1} parent=43 // pred_check_branch
        %577 = sbr.rel (%p575) target = $region52
      $region51: #{conv_stft.1} parent=43 // pred_region
        %p578 = scmp.lt.s32.totalorder %s22, 1
        %s579 = scalar_select %p578, %s22, 1
        %p580 = scmp.lt.s32.totalorder %s23, 0
        %s581 = scalar_select %p580, %s23, 0
        %s582 = smul.addr %s579, 2
        %s583 = sadd.s32 %s581, %s582
        %s584 = smul.addr %s583, 8
        %s585 = scalar_lea.vmem %s4, %s584
      $region52: #{conv_stft.1} parent=43 // pred_fallthru
        _
    $region44: #{conv_stft.1} parent=5 // pred_fallthru
      _
  $region6: #{conv_stft.1} parent=0 // loop_footer
    %s15 = sadd.s32 1, %s11
  $region7: #{conv_stft.1} parent=0 // loop_footer_branch
    %10 = sbr.rel target = $region3
  $region8: #{conv_stft.1} parent=0 // loop_exit
    _

</llo_original>
